<compile_context>
chip_gen: v7x
topology: tpu7x:2x2x1
jax: 0.10.0
libtpu: 0.0.40
codegen_flags: <defaults>
</compile_context>

<pallas_src>
import jax
import jax.numpy as jnp
from jax import lax
from jax.experimental import pallas as pl
from jax.experimental.pallas import tpu as pltpu


def _self_attn_pool_kernel(x_ref, w_ref, o_ref):
    # x_ref: (NB, T, H) input block (NB batch rows per grid step, NB % 8 == 0)
    # w_ref: (1, H)     lane-dense linear weight (shared across the grid)
    # o_ref: (NB, H)    pooled output block (sublane/lane dense)
    nb, t, h = x_ref.shape

    # Lane-dense weight; broadcast prepared once per grid step, outside the group loop.
    w_row = w_ref[...].astype(jnp.float32).reshape(1, 1, h)          # (1, 1, H)

    def group_body(g, carry):
        r0 = pl.multiple_of(g * 8, 8)
        xg = x_ref[pl.ds(r0, 8)].astype(jnp.float32)                 # (8, T, H) f32

        # Attention logits: VPU broadcast-mul + XLU lane reduce over H.
        # (Linear bias intentionally omitted: softmax over T is shift-invariant.)
        logits = jnp.sum(xg * w_row, axis=-1)                        # (8, T) f32

        # Softmax over the sequence axis T, accumulated in f32.
        m = jnp.max(logits, axis=-1, keepdims=True)                  # (8, 1)
        e = jnp.exp(logits - m)                                      # (8, T)
        denom = jnp.sum(e, axis=-1, keepdims=True)                   # (8, 1)
        att = e * pl.reciprocal(denom, approx=False)                 # (8, T)

        # Weighted sum over T (sublane reduce), f32 accumulation; dense 8-row store.
        pooled = jnp.sum(xg * att[:, :, None], axis=1)               # (8, H) f32
        o_ref[pl.ds(r0, 8), :] = pooled.astype(o_ref.dtype)
        return carry

    # Each iteration already carries 8*T*H elements of independent work, so the loop is
    # throughput-bound, not latency-bound; unrolling would only inflate f32 VMEM temps.
    lax.fori_loop(0, nb // 8, group_body, 0)


def _vmem_limit_bytes():
    """Generation-aware scoped-VMEM limit: 3/4 of physical VMEM, capped at 96 MiB.

    v5e/v6e (128 MiB physical) -> 96 MiB; v7x (64 MiB physical) -> 48 MiB.
    Falls back to the v7x-safe 48 MiB if the hardware query is unavailable.
    """
    cap = 64 << 20
    try:
        cap = int(pltpu.get_tpu_info().vmem_capacity_bytes)
    except Exception:
        pass
    return int(min(cap * 3 // 4, 96 << 20))


def _pick_block_n(n, t, h, itemsize, vmem_limit):
    """Batch rows per grid step (multiple of 8).

    Sized so the double-buffered input + output tiles use at most half of the scoped
    VMEM limit; the other half is headroom for per-group f32 temporaries, the weight and
    Mosaic internal scratch.  No divisibility requirement on N (ragged last block is
    masked by Pallas); capped so the grid has >= 2 steps whenever N > 8 (v7x megacore).
    """
    bytes_per_row = 2 * (t * h + h) * itemsize        # dbl-buffered input + output per row
    rows = (vmem_limit // 2) // max(1, bytes_per_row)
    rows = max(8, (rows // 8) * 8)
    if n > 8:                                         # keep >= 2 grid steps for 2-TC chips
        rows = min(rows, max(8, ((-(-n // 2)) + 7) // 8 * 8))
    rows = min(rows, (-(-n // 8)) * 8)                # never larger than the rounded batch
    return rows


def self_attention_pooling(batch_rep, weight, bias=None, *, block_n=None):
    """batch_rep: (N, T, H).  weight: nn.Linear(H, 1) weight as (1, H), (H,) or (H, 1).

    bias is accepted for API parity but is mathematically a no-op under the softmax
    (shift invariance).  Returns the pooled representation of shape (N, H).
    """
    N, T, H = batch_rep.shape
    dtype = batch_rep.dtype
    itemsize = jnp.dtype(dtype).itemsize

    w = jnp.asarray(weight)
    if w.shape == (H, 1):
        w = w.T
    elif w.shape == (H,):
        w = w.reshape(1, H)
    assert w.shape == (1, H), f"unexpected weight shape {w.shape}"
    del bias  # exact: softmax over T is invariant to adding a constant to every logit

    vmem_limit = _vmem_limit_bytes()
    if block_n is None:
        block_n = _pick_block_n(N, T, H, itemsize, vmem_limit)
    assert block_n % 8 == 0, "block_n must be a multiple of 8 (sublane groups)"

    grid = (pl.cdiv(N, block_n),)

    return pl.pallas_call(
        _self_attn_pool_kernel,
        out_shape=jax.ShapeDtypeStruct((N, H), dtype),
        grid_spec=pltpu.PrefetchScalarGridSpec(
            num_scalar_prefetch=0,
            grid=grid,
            in_specs=[
                pl.BlockSpec((block_n, T, H), lambda i: (i, 0, 0)),   # batch block
                pl.BlockSpec((1, H), lambda i: (0, 0)),               # shared lane-dense weight
            ],
            out_specs=pl.BlockSpec((block_n, H), lambda i: (i, 0)),   # dense output block
        ),
        compiler_params=pltpu.CompilerParams(
            dimension_semantics=("parallel",),
            vmem_limit_bytes=vmem_limit,
        ),
        cost_estimate=pl.CostEstimate(
            flops=4 * N * T * H,
            transcendentals=N * T,
            bytes_accessed=(N * T * H + N * H + H) * itemsize,
        ),
    )(batch_rep, w)


def reference(batch_rep, weight, bias):
    """Pure-JAX reference with the bias INCLUDED (elementwise ops only, no MXU), so the
    test also asserts that eliding the bias inside the kernel is exact."""
    x = batch_rep.astype(jnp.float32)
    w = jnp.asarray(weight).reshape(-1).astype(jnp.float32)           # (H,)
    logits = jnp.sum(x * w[None, None, :], axis=-1)                   # (N, T)
    if bias is not None:
        logits = logits + jnp.asarray(bias).reshape(()).astype(jnp.float32)
    att = jax.nn.softmax(logits, axis=1)[..., None]                   # (N, T, 1)
    return jnp.sum(x * att, axis=1).astype(batch_rep.dtype)           # (N, H)


if __name__ == "__main__":
    key = jax.random.PRNGKey(0)
    kx, kw, kb, kx2, kw2, kb2 = jax.random.split(key, 6)

    # ---- Test 1: canonical small shape (N=2, T=8, H=32), single block / single group.
    N, T, H = 2, 8, 32
    x = jax.random.normal(kx, (N, T, H), dtype=jnp.float32)
    bound = 1.0 / (H ** 0.5)                                   # PyTorch nn.Linear init bound
    w = jax.random.uniform(kw, (1, H), minval=-bound, maxval=bound, dtype=jnp.float32)
    b = jax.random.uniform(kb, (1,), minval=-bound, maxval=bound, dtype=jnp.float32)

    out = self_attention_pooling(x, w, b)
    jax.block_until_ready(out)
    ref = reference(x, w, b)
    assert out.shape == (N, H)
    assert jnp.allclose(out, ref, atol=1e-5, rtol=1e-5), "mismatch vs reference (test 1)"

    # ---- Test 2: multiple grid steps, multiple 8-row groups per block, and a ragged
    # last block (N=20, block_n=16) to exercise boundary masking without input padding.
    N2, T2, H2 = 20, 16, 128
    x2 = jax.random.normal(kx2, (N2, T2, H2), dtype=jnp.float32)
    bound2 = 1.0 / (H2 ** 0.5)
    w2 = jax.random.uniform(kw2, (1, H2), minval=-bound2, maxval=bound2, dtype=jnp.float32)
    b2 = jax.random.uniform(kb2, (1,), minval=-bound2, maxval=bound2, dtype=jnp.float32)

    out2 = self_attention_pooling(x2, w2, b2, block_n=16)
    jax.block_until_ready(out2)
    ref2 = reference(x2, w2, b2)
    assert out2.shape == (N2, H2)
    assert jnp.allclose(out2, ref2, atol=1e-5, rtol=1e-5), "mismatch vs reference (test 2)"

    print("KERNEL_OK")
</pallas_src>

<mosaic_0001>
module attributes {stable_mosaic.version = 11 : i64} {
  func.func @_self_attn_pool_kernel(%arg0: i32, %arg1: memref<8x8x32xf32, #tpu.memory_space<vmem>>, %arg2: memref<1x32xf32, #tpu.memory_space<vmem>>, %arg3: memref<8x32xf32, #tpu.memory_space<vmem>>) attributes {dimension_semantics = [#tpu.dimension_semantics<parallel>], iteration_bounds = array<i64: 1>, scalar_prefetch = 0 : i64, scratch_operands = 0 : i64, tpu.core_type = #tpu.core_type<tc>, window_params = [{transform_indices = @transform_0, window_bounds = array<i64: 8, 8, 32>}, {pipeline_mode = #tpu.pipeline_mode<synchronous>, transform_indices = @transform_1, window_bounds = array<i64: 1, 32>}, {transform_indices = @transform_2, window_bounds = array<i64: 8, 32>}]} {
    %c0 = arith.constant 0 : index
    %c0_0 = arith.constant 0 : index
    %0 = vector.load %arg2[%c0, %c0_0] : memref<1x32xf32, #tpu.memory_space<vmem>>, vector<1x32xf32>
    %1 = vector.shape_cast %0 : vector<1x32xf32> to vector<1x1x32xf32>
    %c0_i32 = arith.constant 0 : i32
    %c8_i32 = arith.constant 8 : i32
    %2 = arith.muli %c0_i32, %c8_i32 : i32
    %3 = tpu.assume_multiple %2, 8 : i32
    %4 = arith.index_cast %3 : i32 to index
    %c0_1 = arith.constant 0 : index
    %c0_2 = arith.constant 0 : index
    %5 = vector.load %arg1[%4, %c0_1, %c0_2] : memref<8x8x32xf32, #tpu.memory_space<vmem>>, vector<8x8x32xf32>
    %6 = vector.broadcast %1 : vector<1x1x32xf32> to vector<8x8x32xf32>
    %7 = arith.mulf %5, %6 : vector<8x8x32xf32>
    %cst = arith.constant dense<0.000000e+00> : vector<8x8xf32>
    %8 = vector.multi_reduction <add>, %7, %cst [2] : vector<8x8x32xf32> to vector<8x8xf32>
    %cst_3 = arith.constant dense<0xFF800000> : vector<8xf32>
    %9 = vector.multi_reduction <maximumf>, %8, %cst_3 [1] : vector<8x8xf32> to vector<8xf32>
    %10 = vector.shape_cast %9 : vector<8xf32> to vector<8x1xf32>
    %11 = vector.broadcast %10 : vector<8x1xf32> to vector<8x8xf32>
    %12 = arith.subf %8, %11 : vector<8x8xf32>
    %13 = math.exp %12 : vector<8x8xf32>
    %cst_4 = arith.constant dense<0.000000e+00> : vector<8xf32>
    %14 = vector.multi_reduction <add>, %13, %cst_4 [1] : vector<8x8xf32> to vector<8xf32>
    %15 = vector.shape_cast %14 : vector<8xf32> to vector<8x1xf32>
    %16 = tpu.reciprocal %15 : vector<8x1xf32> -> vector<8x1xf32>
    %17 = vector.broadcast %16 : vector<8x1xf32> to vector<8x8xf32>
    %18 = arith.mulf %13, %17 : vector<8x8xf32>
    %19 = vector.shape_cast %18 : vector<8x8xf32> to vector<8x8x1xf32>
    %20 = vector.broadcast %19 : vector<8x8x1xf32> to vector<8x8x32xf32>
    %21 = arith.mulf %5, %20 : vector<8x8x32xf32>
    %cst_5 = arith.constant dense<0.000000e+00> : vector<8x32xf32>
    %22 = vector.multi_reduction <add>, %21, %cst_5 [1] : vector<8x8x32xf32> to vector<8x32xf32>
    %23 = arith.index_cast %3 : i32 to index
    %c0_6 = arith.constant 0 : index
    %24 = vector.load %arg3[%23, %c0_6] : memref<8x32xf32, #tpu.memory_space<vmem>>, vector<8x32xf32>
    tpu.vector_store %arg3[%23, %c0_6], %22 {strides = array<i32>} : memref<8x32xf32, #tpu.memory_space<vmem>>, vector<8x32xf32>,
    %c1_i32 = arith.constant 1 : i32
    return
  }
  func.func @transform_0(%arg0: i32) -> (i32, i32, i32) {
    %c0_i32 = arith.constant 0 : i32
    %c0_i32_0 = arith.constant 0 : i32
    %c0_i32_1 = arith.constant 0 : i32
    return %arg0, %c0_i32, %c0_i32_0 : i32, i32, i32
  }
  func.func @transform_1(%arg0: i32) -> (i32, i32) {
    %c0_i32 = arith.constant 0 : i32
    %c0_i32_0 = arith.constant 0 : i32
    %c0_i32_1 = arith.constant 0 : i32
    return %c0_i32, %c0_i32_0 : i32, i32
  }
  func.func @transform_2(%arg0: i32) -> (i32, i32) {
    %c0_i32 = arith.constant 0 : i32
    %c0_i32_0 = arith.constant 0 : i32
    return %arg0, %c0_i32 : i32, i32
  }
}

</mosaic_0001>

<llo_original>
// kernel: tpu_custom_call.1
$region0: #{tpu_custom_call.1}
  #allocation0 [shape = 'u32[]', space=smem, size = 0x4, offset = 0x4, fixed_abs, tag = 'smem constant byte address 0x4 - core index']
  #allocation1 [shape = 'u32[144,128]{1,0:T(1,128)}', space=vmem, size = 0x12000, scoped, tag = 'internal scratch']
  %s0 = inlined_call_operand.hbm [shape: f32[2,8,32], index: 0, kind: input, shape index: {}]
  %s1 = inlined_call_operand.vmem [shape: f32[1,32], index: 1, kind: input, shape index: {}]
  %s2 = inlined_call_operand.hbm [shape: f32[2,32], index: 2, kind: output, shape index: {}]
  %s3 = sld [smem:[#allocation0]]
  $region22: #{tpu_custom_call.1} parent=0
    _
  %s5 = ssub.s32 1, %s3
  %s6 = scalar_select 0, %s5, %s3
  $region1: #{tpu_custom_call.1} parent=0
    #allocation2 [shape = 'u8[32768]{0}', space=vmem, size = 0x8000, scoped, tag = 'input window, operand 0, single buffered']
    #allocation3 [shape = 's32[1]{0}', space=sflag, size = 0x4, scoped, tag = 'scoped memory for tpu_custom_call.1']
    #allocation4 [shape = 's32[1]{0}', space=sflag, size = 0x4, scoped, tag = 'scoped memory for tpu_custom_call.1']
    #allocation5 [shape = 'u8[4096]{0}', space=vmem, size = 0x1000, scoped, tag = 'output window, operand 0, single buffered']
    %7 = vsyncpa [#allocation3], 0
    %8 = vsyncpa [#allocation4], 0
    // Predicated region
    $region2: #{tpu_custom_call.1} parent=1 // pred_check
      _
    $region3: #{tpu_custom_call.1} parent=1 // pred_check_branch
      %10 = sbr.rel (0) target = $region5
    $region4: #{tpu_custom_call.1} parent=1 // pred_region
      %s12 = ssub.s32 1024, 256
      %13 = vsyncadd [#allocation3], %s12
      %s14 = sshll.u32 [#allocation2], 4
      %s15 = int_to_ptr.vmem [resolvable:$true] %s14
      %20 = dma.hbm_to_vmem [thread:$0]  %s0, 256, %s15, [#allocation3], 128, 128, 8
    $region5: #{tpu_custom_call.1} parent=1 // pred_fallthru
      _
    // Predicated region
    $region6: #{tpu_custom_call.1} parent=1 // pred_check
      _
    $region7: #{tpu_custom_call.1} parent=1 // pred_check_branch
      %22 = sbr.rel (0) target = $region9
    $region8: #{tpu_custom_call.1} parent=1 // pred_region
      _
    $region9: #{tpu_custom_call.1} parent=1 // pred_fallthru
      _
    // Predicated region
    $region10: #{tpu_custom_call.1} parent=1 // pred_check
      _
    $region11: #{tpu_custom_call.1} parent=1 // pred_check_branch
      %24 = sbr.rel (0) target = $region13
    $region12: #{tpu_custom_call.1} parent=1 // pred_region
      %25 = dma.done [#allocation3], 1024
    $region13: #{tpu_custom_call.1} parent=1 // pred_fallthru
      _
    %v26 = vld [vmem:[%s1] sm:$0x1]
    %s27 = smul.u32 0, 8
    %s28 = scalar_lea.vmem [#allocation2], %s27
    %v29 = vld [vmem:[%s28] sm:$0xff]
    %v30 = vld [vmem:[%s28 + $0x8] sm:$0xff]
    %v31 = vld [vmem:[%s28 + $0x10] sm:$0xff]
    %v32 = vld [vmem:[%s28 + $0x18] sm:$0xff]
    %v33 = vld [vmem:[%s28 + $0x20] sm:$0xff]
    %v34 = vld [vmem:[%s28 + $0x28] sm:$0xff]
    %v35 = vld [vmem:[%s28 + $0x30] sm:$0xff]
    %v36 = vld [vmem:[%s28 + $0x38] sm:$0xff]
    %v38 = vlaneseq
    %v39 = vshrl.u32 %v38, 7
    %v40 = vsub.s32 0, %v39
    %v41 = vrot.slane %v26, %v40
    %v43 = vmul.f32 %v29, %v41
    %v44 = vmul.f32 %v30, %v41
    %v45 = vmul.f32 %v31, %v41
    %v46 = vmul.f32 %v32, %v41
    %v47 = vmul.f32 %v33, %v41
    %v48 = vmul.f32 %v34, %v41
    %v49 = vmul.f32 %v35, %v41
    %v50 = vmul.f32 %v36, %v41
    %vm51 = vcmask 261120
    %v52 = vsel %vm51, %v43, 0.0
    %53 = vadd.xlane.f32.xlu0 %v52
    %v54 = vpop.xlane.xlu0 %53
    %v55 = vsel %vm51, %v44, 0.0
    %56 = vadd.xlane.f32.xlu0 %v55
    %v57 = vpop.xlane.xlu0 %56
    %v58 = vsel %vm51, %v45, 0.0
    %59 = vadd.xlane.f32.xlu0 %v58
    %v60 = vpop.xlane.xlu0 %59
    %v61 = vsel %vm51, %v46, 0.0
    %62 = vadd.xlane.f32.xlu0 %v61
    %v63 = vpop.xlane.xlu0 %62
    %v64 = vsel %vm51, %v47, 0.0
    %65 = vadd.xlane.f32.xlu0 %v64
    %v66 = vpop.xlane.xlu0 %65
    %v67 = vsel %vm51, %v48, 0.0
    %68 = vadd.xlane.f32.xlu0 %v67
    %v69 = vpop.xlane.xlu0 %68
    %v70 = vsel %vm51, %v49, 0.0
    %71 = vadd.xlane.f32.xlu0 %v70
    %v72 = vpop.xlane.xlu0 %71
    %v73 = vsel %vm51, %v50, 0.0
    %74 = vadd.xlane.f32.xlu0 %v73
    %v75 = vpop.xlane.xlu0 %74
    %v84 = vlaneseq
    %v85 = vand.u32 %v84, 127
    %v86 = vlaneseq
    %v87 = vshrl.u32 %v86, 7
    %v88 = vsub.s32 %v85, %v87
    %v89 = vrot.slane %v54, %v88
    %v90 = vlaneseq
    %v91 = vshrl.u32 %v90, 7
    %v92 = vsub.s32 %v85, %v91
    %v93 = vrot.slane %v57, %v92
    %v94 = vlaneseq
    %v95 = vshrl.u32 %v94, 7
    %v96 = vsub.s32 %v85, %v95
    %v97 = vrot.slane %v60, %v96
    %v98 = vlaneseq
    %v99 = vshrl.u32 %v98, 7
    %v100 = vsub.s32 %v85, %v99
    %v101 = vrot.slane %v63, %v100
    %v102 = vlaneseq
    %v103 = vshrl.u32 %v102, 7
    %v104 = vsub.s32 %v85, %v103
    %v105 = vrot.slane %v66, %v104
    %v106 = vlaneseq
    %v107 = vshrl.u32 %v106, 7
    %v108 = vsub.s32 %v85, %v107
    %v109 = vrot.slane %v69, %v108
    %v110 = vlaneseq
    %v111 = vshrl.u32 %v110, 7
    %v112 = vsub.s32 %v85, %v111
    %v113 = vrot.slane %v72, %v112
    %v114 = vlaneseq
    %v115 = vshrl.u32 %v114, 7
    %v116 = vsub.s32 %v85, %v115
    %v117 = vrot.slane %v75, %v116
    %vm118 = vcmask 1041409
    %v119 = vsel %vm118, %v93, %v89
    %vm120 = vcmask 1042434
    %v121 = vsel %vm120, %v97, %v119
    %vm122 = vcmask 1043459
    %v123 = vsel %vm122, %v101, %v121
    %vm124 = vcmask 1044484
    %v125 = vsel %vm124, %v105, %v123
    %vm126 = vcmask 1045509
    %v127 = vsel %vm126, %v109, %v125
    %vm128 = vcmask 1046534
    %v129 = vsel %vm128, %v113, %v127
    %vm130 = vcmask 1047559
    %v131 = vsel %vm130, %v117, %v129
    %vm133 = vcmask 64512
    %v134 = vsel %vm133, %v131, -inf
    %135 = vmax.xlane.f32.xlu0 %v134
    %v136 = vpop.xlane.xlu0 %135
    %v138 = vlaneseq
    %v139 = vshrl.u32 %v138, 7
    %v140 = vsub.s32 0, %v139
    %v141 = vrot.slane %v136, %v140
    %v142 = vlaneseq
    %v143 = vshrl.u32 %v142, 7
    %v144 = vsub.s32 1, %v143
    %v145 = vrot.slane %v136, %v144
    %v146 = vlaneseq
    %v147 = vshrl.u32 %v146, 7
    %v148 = vsub.s32 2, %v147
    %v149 = vrot.slane %v136, %v148
    %v150 = vlaneseq
    %v151 = vshrl.u32 %v150, 7
    %v152 = vsub.s32 3, %v151
    %v153 = vrot.slane %v136, %v152
    %v154 = vlaneseq
    %v155 = vshrl.u32 %v154, 7
    %v156 = vsub.s32 4, %v155
    %v157 = vrot.slane %v136, %v156
    %v158 = vlaneseq
    %v159 = vshrl.u32 %v158, 7
    %v160 = vsub.s32 5, %v159
    %v161 = vrot.slane %v136, %v160
    %v162 = vlaneseq
    %v163 = vshrl.u32 %v162, 7
    %v164 = vsub.s32 6, %v163
    %v165 = vrot.slane %v136, %v164
    %v166 = vlaneseq
    %v167 = vshrl.u32 %v166, 7
    %v168 = vsub.s32 7, %v167
    %v169 = vrot.slane %v136, %v168
    %v178 = vsub.f32 %v54, %v141
    %v179 = vsub.f32 %v57, %v145
    %v180 = vsub.f32 %v60, %v149
    %v181 = vsub.f32 %v63, %v153
    %v182 = vsub.f32 %v66, %v157
    %v183 = vsub.f32 %v69, %v161
    %v184 = vsub.f32 %v72, %v165
    %v185 = vsub.f32 %v75, %v169
    %v186 = vmul.f32 %v178, 1.442695
    %v187 = vpow.pop %v186
    %v188 = vmul.f32 %v179, 1.442695
    %v189 = vpow.pop %v188
    %v190 = vmul.f32 %v180, 1.442695
    %v191 = vpow.pop %v190
    %v192 = vmul.f32 %v181, 1.442695
    %v193 = vpow.pop %v192
    %v194 = vmul.f32 %v182, 1.442695
    %v195 = vpow.pop %v194
    %v196 = vmul.f32 %v183, 1.442695
    %v197 = vpow.pop %v196
    %v198 = vmul.f32 %v184, 1.442695
    %v199 = vpow.pop %v198
    %v200 = vmul.f32 %v185, 1.442695
    %v201 = vpow.pop %v200
    %210 = vset.pattern.permute.xlu0 0
    %211 = vperm.xlu0 %210, %v187
    %v212 = vpop.permute.xlu0 %211
    %213 = vset.pattern.permute.xlu0 0
    %214 = vperm.xlu0 %213, %v189
    %v215 = vpop.permute.xlu0 %214
    %216 = vset.pattern.permute.xlu0 0
    %217 = vperm.xlu0 %216, %v191
    %v218 = vpop.permute.xlu0 %217
    %219 = vset.pattern.permute.xlu0 0
    %220 = vperm.xlu0 %219, %v193
    %v221 = vpop.permute.xlu0 %220
    %222 = vset.pattern.permute.xlu0 0
    %223 = vperm.xlu0 %222, %v195
    %v224 = vpop.permute.xlu0 %223
    %225 = vset.pattern.permute.xlu0 0
    %226 = vperm.xlu0 %225, %v197
    %v227 = vpop.permute.xlu0 %226
    %228 = vset.pattern.permute.xlu0 0
    %229 = vperm.xlu0 %228, %v199
    %v230 = vpop.permute.xlu0 %229
    %231 = vset.pattern.permute.xlu0 0
    %232 = vperm.xlu0 %231, %v201
    %v233 = vpop.permute.xlu0 %232
    %v234 = vlaneseq
    %v235 = vshrl.u32 %v234, 7
    %v236 = vsub.s32 %v85, %v235
    %v237 = vrot.slane %v212, %v236
    %v238 = vlaneseq
    %v239 = vshrl.u32 %v238, 7
    %v240 = vsub.s32 %v85, %v239
    %v241 = vrot.slane %v215, %v240
    %v242 = vlaneseq
    %v243 = vshrl.u32 %v242, 7
    %v244 = vsub.s32 %v85, %v243
    %v245 = vrot.slane %v218, %v244
    %v246 = vlaneseq
    %v247 = vshrl.u32 %v246, 7
    %v248 = vsub.s32 %v85, %v247
    %v249 = vrot.slane %v221, %v248
    %v250 = vlaneseq
    %v251 = vshrl.u32 %v250, 7
    %v252 = vsub.s32 %v85, %v251
    %v253 = vrot.slane %v224, %v252
    %v254 = vlaneseq
    %v255 = vshrl.u32 %v254, 7
    %v256 = vsub.s32 %v85, %v255
    %v257 = vrot.slane %v227, %v256
    %v258 = vlaneseq
    %v259 = vshrl.u32 %v258, 7
    %v260 = vsub.s32 %v85, %v259
    %v261 = vrot.slane %v230, %v260
    %v262 = vlaneseq
    %v263 = vshrl.u32 %v262, 7
    %v264 = vsub.s32 %v85, %v263
    %v265 = vrot.slane %v233, %v264
    %v266 = vsel %vm118, %v241, %v237
    %v267 = vsel %vm120, %v245, %v266
    %v268 = vsel %vm122, %v249, %v267
    %v269 = vsel %vm124, %v253, %v268
    %v270 = vsel %vm126, %v257, %v269
    %v271 = vsel %vm128, %v261, %v270
    %v272 = vsel %vm130, %v265, %v271
    %v274 = vsel %vm133, %v272, 0.0
    %275 = vadd.xlane.f32.xlu0 %v274
    %v276 = vpop.xlane.xlu0 %275
    %v277 = vrcp.pop %v276
    %v279 = vlaneseq
    %v280 = vshrl.u32 %v279, 7
    %v281 = vsub.s32 0, %v280
    %v282 = vrot.slane %v277, %v281
    %v283 = vlaneseq
    %v284 = vshrl.u32 %v283, 7
    %v285 = vsub.s32 1, %v284
    %v286 = vrot.slane %v277, %v285
    %v287 = vlaneseq
    %v288 = vshrl.u32 %v287, 7
    %v289 = vsub.s32 2, %v288
    %v290 = vrot.slane %v277, %v289
    %v291 = vlaneseq
    %v292 = vshrl.u32 %v291, 7
    %v293 = vsub.s32 3, %v292
    %v294 = vrot.slane %v277, %v293
    %v295 = vlaneseq
    %v296 = vshrl.u32 %v295, 7
    %v297 = vsub.s32 4, %v296
    %v298 = vrot.slane %v277, %v297
    %v299 = vlaneseq
    %v300 = vshrl.u32 %v299, 7
    %v301 = vsub.s32 5, %v300
    %v302 = vrot.slane %v277, %v301
    %v303 = vlaneseq
    %v304 = vshrl.u32 %v303, 7
    %v305 = vsub.s32 6, %v304
    %v306 = vrot.slane %v277, %v305
    %v307 = vlaneseq
    %v308 = vshrl.u32 %v307, 7
    %v309 = vsub.s32 7, %v308
    %v310 = vrot.slane %v277, %v309
    %v319 = vmul.f32 %v187, %v282
    %v320 = vmul.f32 %v189, %v286
    %v321 = vmul.f32 %v191, %v290
    %v322 = vmul.f32 %v193, %v294
    %v323 = vmul.f32 %v195, %v298
    %v324 = vmul.f32 %v197, %v302
    %v325 = vmul.f32 %v199, %v306
    %v326 = vmul.f32 %v201, %v310
    %328 = vset.pattern.permute.xlu0 0
    %329 = vperm.xlu0 %328, %v319
    %v330 = vpop.permute.xlu0 %329
    %333 = vset.pattern.permute.xlu0 0
    %334 = vperm.xlu0 %333, %v320
    %v335 = vpop.permute.xlu0 %334
    %338 = vset.pattern.permute.xlu0 0
    %339 = vperm.xlu0 %338, %v321
    %v340 = vpop.permute.xlu0 %339
    %343 = vset.pattern.permute.xlu0 0
    %344 = vperm.xlu0 %343, %v322
    %v345 = vpop.permute.xlu0 %344
    %348 = vset.pattern.permute.xlu0 0
    %349 = vperm.xlu0 %348, %v323
    %v350 = vpop.permute.xlu0 %349
    %353 = vset.pattern.permute.xlu0 0
    %354 = vperm.xlu0 %353, %v324
    %v355 = vpop.permute.xlu0 %354
    %358 = vset.pattern.permute.xlu0 0
    %359 = vperm.xlu0 %358, %v325
    %v360 = vpop.permute.xlu0 %359
    %363 = vset.pattern.permute.xlu0 0
    %364 = vperm.xlu0 %363, %v326
    %v365 = vpop.permute.xlu0 %364
    %v367 = vmul.f32 %v29, %v330
    %v368 = vmul.f32 %v30, %v335
    %v369 = vmul.f32 %v31, %v340
    %v370 = vmul.f32 %v32, %v345
    %v371 = vmul.f32 %v33, %v350
    %v372 = vmul.f32 %v34, %v355
    %v373 = vmul.f32 %v35, %v360
    %v374 = vmul.f32 %v36, %v365
    %v375 = vsel %vm51, %v367, 0.0
    %v376 = vrot.slane %v375, 4
    %v377 = vadd.f32 %v375, %v376
    %v378 = vrot.slane %v377, 2
    %v379 = vadd.f32 %v377, %v378
    %v380 = vrot.slane %v379, 1
    %v381 = vadd.f32 %v379, %v380
    %v382 = vsel %vm51, %v368, 0.0
    %v383 = vrot.slane %v382, 4
    %v384 = vadd.f32 %v382, %v383
    %v385 = vrot.slane %v384, 2
    %v386 = vadd.f32 %v384, %v385
    %v387 = vrot.slane %v386, 1
    %v388 = vadd.f32 %v386, %v387
    %v389 = vsel %vm51, %v369, 0.0
    %v390 = vrot.slane %v389, 4
    %v391 = vadd.f32 %v389, %v390
    %v392 = vrot.slane %v391, 2
    %v393 = vadd.f32 %v391, %v392
    %v394 = vrot.slane %v393, 1
    %v395 = vadd.f32 %v393, %v394
    %v396 = vsel %vm51, %v370, 0.0
    %v397 = vrot.slane %v396, 4
    %v398 = vadd.f32 %v396, %v397
    %v399 = vrot.slane %v398, 2
    %v400 = vadd.f32 %v398, %v399
    %v401 = vrot.slane %v400, 1
    %v402 = vadd.f32 %v400, %v401
    %v403 = vsel %vm51, %v371, 0.0
    %v404 = vrot.slane %v403, 4
    %v405 = vadd.f32 %v403, %v404
    %v406 = vrot.slane %v405, 2
    %v407 = vadd.f32 %v405, %v406
    %v408 = vrot.slane %v407, 1
    %v409 = vadd.f32 %v407, %v408
    %v410 = vsel %vm51, %v372, 0.0
    %v411 = vrot.slane %v410, 4
    %v412 = vadd.f32 %v410, %v411
    %v413 = vrot.slane %v412, 2
    %v414 = vadd.f32 %v412, %v413
    %v415 = vrot.slane %v414, 1
    %v416 = vadd.f32 %v414, %v415
    %v417 = vsel %vm51, %v373, 0.0
    %v418 = vrot.slane %v417, 4
    %v419 = vadd.f32 %v417, %v418
    %v420 = vrot.slane %v419, 2
    %v421 = vadd.f32 %v419, %v420
    %v422 = vrot.slane %v421, 1
    %v423 = vadd.f32 %v421, %v422
    %v424 = vsel %vm51, %v374, 0.0
    %v425 = vrot.slane %v424, 4
    %v426 = vadd.f32 %v424, %v425
    %v427 = vrot.slane %v426, 2
    %v428 = vadd.f32 %v426, %v427
    %v429 = vrot.slane %v428, 1
    %v430 = vadd.f32 %v428, %v429
    %v439 = vsel %vm118, %v388, %v381
    %v440 = vsel %vm120, %v395, %v439
    %v441 = vsel %vm122, %v402, %v440
    %v442 = vsel %vm124, %v409, %v441
    %v443 = vsel %vm126, %v416, %v442
    %v444 = vsel %vm128, %v423, %v443
    %v445 = vsel %vm130, %v430, %v444
    %447 = vst.msk [vmem:[#allocation5] sm:$0xff] %vm51, %v445
    // Predicated region
    $region14: #{tpu_custom_call.1} parent=1 // pred_check
      _
    $region15: #{tpu_custom_call.1} parent=1 // pred_check_branch
      %449 = sbr.rel (0) target = $region17
    $region16: #{tpu_custom_call.1} parent=1 // pred_region
      %s451 = ssub.s32 128, 32
      %452 = vsyncadd [#allocation4], %s451
      %s453 = sshll.u32 [#allocation5], 4
      %s454 = int_to_ptr.vmem [resolvable:$true] %s453
      %459 = dma.vmem_to_hbm [thread:$0]  %s454, 32, %s2, [#allocation4], 32, 32, 2
    $region17: #{tpu_custom_call.1} parent=1 // pred_fallthru
      _
    // Predicated region
    $region18: #{tpu_custom_call.1} parent=1 // pred_check
      _
    $region19: #{tpu_custom_call.1} parent=1 // pred_check_branch
      %461 = sbr.rel (0) target = $region21
    $region20: #{tpu_custom_call.1} parent=1 // pred_region
      %462 = dma.done [#allocation4], 128
    $region21: #{tpu_custom_call.1} parent=1 // pred_fallthru
      _
    %463 = vsyncpa [#allocation3], 1
    %464 = vsyncpa [#allocation4], 1

</llo_original>
